<compile_context>
chip_gen: v6e
topology: v6e:2x2x1
jax: 0.10.0
libtpu: 0.0.40
codegen_flags: <defaults>
</compile_context>

<pallas_src>
import numpy as np
import jax
import jax.numpy as jnp
from jax.experimental import pallas as pl
from jax.experimental.pallas import tpu as pltpu


# ----------------------------------------------------------------------------
# Fused Pallas kernel: conv-GEMM + ReLU + dense1 + ReLU + dense2 + softmax
# ----------------------------------------------------------------------------
def fused_forward_kernel(x_ref, g_ref, bc_ref, w1_ref, b1_ref, w2_ref, b2_ref,
                         o_ref):
    # x_ref : (TB, Cin*H*W)        flattened NCHW input block
    # g_ref : (Cin*H*W, Cout*H*W)  conv-as-GEMM matrix, columns in Flatten order
    # bc_ref: (1, Cout*H*W)        conv bias repeated per spatial position
    # w1_ref: (Cout*H*W, D1)       dense1 weight (pre-transposed)
    # w2_ref: (D1, OUT)            dense2 weight (pre-transposed)
    # o_ref : (TB, OUT)            softmax probabilities

    # Conv2d(pad=1) + Flatten folded into one GEMM, then ReLU.
    flat = jnp.dot(x_ref[...], g_ref[...], preferred_element_type=jnp.float32)
    flat = jnp.maximum(flat + bc_ref[...], 0.0)

    # Dense 1 + ReLU (stays in vregs).
    h = jnp.dot(flat, w1_ref[...], preferred_element_type=jnp.float32)
    h = jnp.maximum(h + b1_ref[...], 0.0)

    # Dense 2 -> logits.
    logits = jnp.dot(h, w2_ref[...], preferred_element_type=jnp.float32)
    logits = logits + b2_ref[...]

    # Numerically stable softmax along dim=1; reciprocal on the EUP slot.
    m = jnp.max(logits, axis=1, keepdims=True)
    e = jnp.exp(logits - m)
    denom = jnp.sum(e, axis=1, keepdims=True)
    o_ref[...] = e * pl.reciprocal(denom, approx=True)


# ----------------------------------------------------------------------------
# Trace-time folding: conv (padding + im2col) + NCHW flatten -> constant matrix
# ----------------------------------------------------------------------------
def _conv_as_gemm_matrix(Wc, H, W, pad):
    """Return G with  G[ci*H*W + r*W + c, co*H*W + h*W + w] = Wc[co, ci, kh, kw]
    for r = h + kh - pad, c = w + kw - pad (taps landing on the zero padding are
    dropped).  Column order co*H*W + h*W + w equals torch.nn.Flatten applied to
    the NCHW conv output, so the dense weights need no permutation."""
    Cout, Cin, K, _ = Wc.shape
    rows, cols, co_i, ci_i, kh_i, kw_i = [], [], [], [], [], []
    for co in range(Cout):
        for ci in range(Cin):
            for kh in range(K):
                for kw in range(K):
                    for h in range(H):
                        for w in range(W):
                            r, c = h + kh - pad, w + kw - pad
                            if 0 <= r < H and 0 <= c < W:
                                rows.append(ci * H * W + r * W + c)
                                cols.append(co * H * W + h * W + w)
                                co_i.append(co)
                                ci_i.append(ci)
                                kh_i.append(kh)
                                kw_i.append(kw)
    vals = Wc[np.array(co_i), np.array(ci_i), np.array(kh_i), np.array(kw_i)]
    G = jnp.zeros((Cin * H * W, Cout * H * W), jnp.float32)
    return G.at[np.array(rows), np.array(cols)].add(vals.astype(jnp.float32))


# ----------------------------------------------------------------------------
# Wrapper
# ----------------------------------------------------------------------------
def neural_network_forward(x, params):
    """x: (N, Cin, H, W) float32 NCHW, exactly like the PyTorch module."""
    Wc, bc, W1, b1, W2, b2 = params
    N, Cin, H, W = x.shape
    Cout = Wc.shape[0]
    pad = 1
    in_dim = Cin * H * W          # 64
    flat_dim = Cout * H * W       # 128
    d1 = W1.shape[0]              # 32
    out_dim = W2.shape[0]         # 8

    # Constant-folded under jit when params are constants.
    G = _conv_as_gemm_matrix(Wc, H, W, pad)                       # (64, 128)
    bconv = jnp.repeat(bc.astype(jnp.float32), H * W).reshape(1, flat_dim)
    W1t = W1.T.astype(jnp.float32)                                # (128, 32)
    b1r = b1.reshape(1, d1).astype(jnp.float32)
    W2t = W2.T.astype(jnp.float32)                                # (32, 8)
    b2r = b2.reshape(1, out_dim).astype(jnp.float32)

    x_flat = x.reshape(N, in_dim).astype(jnp.float32)             # free reshape

    # Batch tiling: single block at small N, parallel grid for big batches.
    tb = N if N <= 128 else 128
    grid = (pl.cdiv(N, tb),)

    def bcast(shape):  # weight/bias blocks reused by every grid step
        return pl.BlockSpec(shape, lambda i: (0, 0))

    return pl.pallas_call(
        fused_forward_kernel,
        out_shape=jax.ShapeDtypeStruct((N, out_dim), jnp.float32),
        grid=grid,
        in_specs=[
            pl.BlockSpec((tb, in_dim), lambda i: (i, 0)),   # x
            bcast((in_dim, flat_dim)),                      # G (conv as GEMM)
            bcast((1, flat_dim)),                           # conv bias
            bcast((flat_dim, d1)),                          # W1^T
            bcast((1, d1)),                                 # b1
            bcast((d1, out_dim)),                           # W2^T
            bcast((1, out_dim)),                            # b2
        ],
        out_specs=pl.BlockSpec((tb, out_dim), lambda i: (i, 0)),
        compiler_params=pltpu.CompilerParams(
            dimension_semantics=("parallel",)),
    )(x_flat, G, bconv, W1t, b1r, W2t, b2r)


# ----------------------------------------------------------------------------
# Pure-JAX reference of the PyTorch forward (for correctness check)
# ----------------------------------------------------------------------------
def reference_forward(x, params):
    Wc, bc, W1, b1, W2, b2 = params
    y = jax.lax.conv_general_dilated(
        x, Wc, window_strides=(1, 1), padding=((1, 1), (1, 1)),
        dimension_numbers=("NCHW", "OIHW", "NCHW"),
        precision=jax.lax.Precision.HIGHEST)
    y = jnp.maximum(y + bc[None, :, None, None], 0.0)
    y = y.reshape(y.shape[0], -1)
    y = jnp.maximum(
        jnp.dot(y, W1.T, precision=jax.lax.Precision.HIGHEST) + b1, 0.0)
    y = jnp.dot(y, W2.T, precision=jax.lax.Precision.HIGHEST) + b2
    return jax.nn.softmax(y, axis=1)


# ----------------------------------------------------------------------------
# Deterministic parameter construction (synthetic, PyTorch-shaped)
# ----------------------------------------------------------------------------
def init_params(key, input_size=17, output_size=8, cin=4, cout=8, k=3, d1=32):
    dense_in = cout * (input_size - 1)                  # 8 * 16 = 128
    keys = jax.random.split(key, 6)
    Wc = jax.random.normal(keys[0], (cout, cin, k, k), jnp.float32) * 0.1
    bc = jax.random.normal(keys[1], (cout,), jnp.float32) * 0.1
    W1 = jax.random.normal(keys[2], (d1, dense_in), jnp.float32) * 0.1
    b1 = jax.random.normal(keys[3], (d1,), jnp.float32) * 0.1
    W2 = jax.random.normal(keys[4], (output_size, d1), jnp.float32) * 0.1
    b2 = jax.random.normal(keys[5], (output_size,), jnp.float32) * 0.1
    return (Wc, bc, W1, b1, W2, b2)


if __name__ == "__main__":
    key = jax.random.PRNGKey(0)
    k_x, k_p = jax.random.split(key)

    # inputSize=17 -> flatten spatial size = inputSize-1 = 16 = 4x4
    N, Cin, H, W = 2, 4, 4, 4
    x = jax.random.normal(k_x, (N, Cin, H, W), jnp.float32)
    params = init_params(k_p)

    fwd = jax.jit(lambda xx: neural_network_forward(xx, params))
    out = jax.block_until_ready(fwd(x))

    assert out.shape == (N, 8), out.shape
    # softmax rows sum to 1 (approx reciprocal on the EUP -> modest tolerance)
    assert jnp.allclose(jnp.sum(out, axis=1), 1.0, atol=5e-3), jnp.sum(out, axis=1)
    # end-to-end check against the pure-JAX reference of the PyTorch forward
    ref = reference_forward(x, params)
    assert jnp.allclose(out, ref, atol=2e-2), float(jnp.max(jnp.abs(out - ref)))
    print("KERNEL_OK")
</pallas_src>

<mosaic_0001>
module attributes {stable_mosaic.version = 11 : i64} {
  func.func @fused_forward_kernel(%arg0: i32, %arg1: memref<2x64xf32, #tpu.memory_space<vmem>>, %arg2: memref<64x128xf32, #tpu.memory_space<vmem>>, %arg3: memref<1x128xf32, #tpu.memory_space<vmem>>, %arg4: memref<128x32xf32, #tpu.memory_space<vmem>>, %arg5: memref<1x32xf32, #tpu.memory_space<vmem>>, %arg6: memref<32x8xf32, #tpu.memory_space<vmem>>, %arg7: memref<1x8xf32, #tpu.memory_space<vmem>>, %arg8: memref<2x8xf32, #tpu.memory_space<vmem>>) attributes {dimension_semantics = [#tpu.dimension_semantics<parallel>], iteration_bounds = array<i64: 1>, scalar_prefetch = 0 : i64, scratch_operands = 0 : i64, tpu.core_type = #tpu.core_type<tc>, window_params = [{transform_indices = @transform_0, window_bounds = array<i64: 2, 64>}, {pipeline_mode = #tpu.pipeline_mode<synchronous>, transform_indices = @transform_1, window_bounds = array<i64: 64, 128>}, {pipeline_mode = #tpu.pipeline_mode<synchronous>, transform_indices = @transform_2, window_bounds = array<i64: 1, 128>}, {pipeline_mode = #tpu.pipeline_mode<synchronous>, transform_indices = @transform_3, window_bounds = array<i64: 128, 32>}, {pipeline_mode = #tpu.pipeline_mode<synchronous>, transform_indices = @transform_4, window_bounds = array<i64: 1, 32>}, {pipeline_mode = #tpu.pipeline_mode<synchronous>, transform_indices = @transform_5, window_bounds = array<i64: 32, 8>}, {pipeline_mode = #tpu.pipeline_mode<synchronous>, transform_indices = @transform_6, window_bounds = array<i64: 1, 8>}, {transform_indices = @transform_7, window_bounds = array<i64: 2, 8>}]} {
    %c0 = arith.constant 0 : index
    %c0_0 = arith.constant 0 : index
    %0 = vector.load %arg1[%c0, %c0_0] : memref<2x64xf32, #tpu.memory_space<vmem>>, vector<2x64xf32>
    %c0_1 = arith.constant 0 : index
    %c0_2 = arith.constant 0 : index
    %1 = vector.load %arg2[%c0_1, %c0_2] : memref<64x128xf32, #tpu.memory_space<vmem>>, vector<64x128xf32>
    %cst = arith.constant dense<0.000000e+00> : vector<2x128xf32>
    %2 = tpu.matmul %0, %1, %cst {dimension_numbers = #tpu.dot_dimension_numbers<[1], [0], [0], [1], [0, 0, 1, 1], [], []>} : vector<2x64xf32>, vector<64x128xf32>, vector<2x128xf32> -> vector<2x128xf32>
    %c0_3 = arith.constant 0 : index
    %c0_4 = arith.constant 0 : index
    %3 = vector.load %arg3[%c0_3, %c0_4] : memref<1x128xf32, #tpu.memory_space<vmem>>, vector<1x128xf32>
    %4 = vector.broadcast %3 : vector<1x128xf32> to vector<2x128xf32>
    %5 = arith.addf %2, %4 : vector<2x128xf32>
    %cst_5 = arith.constant 0.000000e+00 : f32
    %6 = vector.broadcast %cst_5 : f32 to vector<2x128xf32>
    %7 = arith.maximumf %5, %6 : vector<2x128xf32>
    %c0_6 = arith.constant 0 : index
    %c0_7 = arith.constant 0 : index
    %8 = vector.load %arg4[%c0_6, %c0_7] : memref<128x32xf32, #tpu.memory_space<vmem>>, vector<128x32xf32>
    %cst_8 = arith.constant dense<0.000000e+00> : vector<2x32xf32>
    %9 = tpu.matmul %7, %8, %cst_8 {dimension_numbers = #tpu.dot_dimension_numbers<[1], [0], [0], [1], [0, 0, 1, 1], [], []>} : vector<2x128xf32>, vector<128x32xf32>, vector<2x32xf32> -> vector<2x32xf32>
    %c0_9 = arith.constant 0 : index
    %c0_10 = arith.constant 0 : index
    %10 = vector.load %arg5[%c0_9, %c0_10] : memref<1x32xf32, #tpu.memory_space<vmem>>, vector<1x32xf32>
    %11 = vector.broadcast %10 : vector<1x32xf32> to vector<2x32xf32>
    %12 = arith.addf %9, %11 : vector<2x32xf32>
    %cst_11 = arith.constant 0.000000e+00 : f32
    %13 = vector.broadcast %cst_11 : f32 to vector<2x32xf32>
    %14 = arith.maximumf %12, %13 : vector<2x32xf32>
    %c0_12 = arith.constant 0 : index
    %c0_13 = arith.constant 0 : index
    %15 = vector.load %arg6[%c0_12, %c0_13] : memref<32x8xf32, #tpu.memory_space<vmem>>, vector<32x8xf32>
    %cst_14 = arith.constant dense<0.000000e+00> : vector<2x8xf32>
    %16 = tpu.matmul %14, %15, %cst_14 {dimension_numbers = #tpu.dot_dimension_numbers<[1], [0], [0], [1], [0, 0, 1, 1], [], []>} : vector<2x32xf32>, vector<32x8xf32>, vector<2x8xf32> -> vector<2x8xf32>
    %c0_15 = arith.constant 0 : index
    %c0_16 = arith.constant 0 : index
    %17 = vector.load %arg7[%c0_15, %c0_16] : memref<1x8xf32, #tpu.memory_space<vmem>>, vector<1x8xf32>
    %18 = vector.broadcast %17 : vector<1x8xf32> to vector<2x8xf32>
    %19 = arith.addf %16, %18 : vector<2x8xf32>
    %cst_17 = arith.constant dense<0xFF800000> : vector<2xf32>
    %20 = vector.multi_reduction <maximumf>, %19, %cst_17 [1] : vector<2x8xf32> to vector<2xf32>
    %21 = vector.shape_cast %20 : vector<2xf32> to vector<2x1xf32>
    %22 = vector.broadcast %21 : vector<2x1xf32> to vector<2x8xf32>
    %23 = arith.subf %19, %22 : vector<2x8xf32>
    %24 = math.exp %23 : vector<2x8xf32>
    %cst_18 = arith.constant dense<0.000000e+00> : vector<2xf32>
    %25 = vector.multi_reduction <add>, %24, %cst_18 [1] : vector<2x8xf32> to vector<2xf32>
    %26 = vector.shape_cast %25 : vector<2xf32> to vector<2x1xf32>
    %27 = tpu.reciprocal %26 {approx = true} : vector<2x1xf32> -> vector<2x1xf32>
    %28 = vector.broadcast %27 : vector<2x1xf32> to vector<2x8xf32>
    %29 = arith.mulf %24, %28 : vector<2x8xf32>
    %c0_19 = arith.constant 0 : index
    %c0_20 = arith.constant 0 : index
    %30 = vector.load %arg8[%c0_19, %c0_20] : memref<2x8xf32, #tpu.memory_space<vmem>>, vector<2x8xf32>
    tpu.vector_store %arg8[%c0_19, %c0_20], %29 {strides = array<i32>} : memref<2x8xf32, #tpu.memory_space<vmem>>, vector<2x8xf32>,
    return
  }
  func.func @transform_0(%arg0: i32) -> (i32, i32) {
    %c0_i32 = arith.constant 0 : i32
    %c0_i32_0 = arith.constant 0 : i32
    return %arg0, %c0_i32 : i32, i32
  }
  func.func @transform_1(%arg0: i32) -> (i32, i32) {
    %c0_i32 = arith.constant 0 : i32
    %c0_i32_0 = arith.constant 0 : i32
    %c0_i32_1 = arith.constant 0 : i32
    return %c0_i32, %c0_i32_0 : i32, i32
  }
  func.func @transform_2(%arg0: i32) -> (i32, i32) {
    %c0_i32 = arith.constant 0 : i32
    %c0_i32_0 = arith.constant 0 : i32
    %c0_i32_1 = arith.constant 0 : i32
    return %c0_i32, %c0_i32_0 : i32, i32
  }
  func.func @transform_3(%arg0: i32) -> (i32, i32) {
    %c0_i32 = arith.constant 0 : i32
    %c0_i32_0 = arith.constant 0 : i32
    %c0_i32_1 = arith.constant 0 : i32
    return %c0_i32, %c0_i32_0 : i32, i32
  }
  func.func @transform_4(%arg0: i32) -> (i32, i32) {
    %c0_i32 = arith.constant 0 : i32
    %c0_i32_0 = arith.constant 0 : i32
    %c0_i32_1 = arith.constant 0 : i32
    return %c0_i32, %c0_i32_0 : i32, i32
  }
  func.func @transform_5(%arg0: i32) -> (i32, i32) {
    %c0_i32 = arith.constant 0 : i32
    %c0_i32_0 = arith.constant 0 : i32
    %c0_i32_1 = arith.constant 0 : i32
    return %c0_i32, %c0_i32_0 : i32, i32
  }
  func.func @transform_6(%arg0: i32) -> (i32, i32) {
    %c0_i32 = arith.constant 0 : i32
    %c0_i32_0 = arith.constant 0 : i32
    %c0_i32_1 = arith.constant 0 : i32
    return %c0_i32, %c0_i32_0 : i32, i32
  }
  func.func @transform_7(%arg0: i32) -> (i32, i32) {
    %c0_i32 = arith.constant 0 : i32
    %c0_i32_0 = arith.constant 0 : i32
    return %arg0, %c0_i32 : i32, i32
  }
}

</mosaic_0001>

<llo_original>
// kernel: _lambda_.1
$region0: #{_lambda_.1}
  #allocation0 [shape = 'u32[]', space=smem, size = 0x4, offset = 0x4, fixed_abs, tag = 'smem constant byte address 0x4 - core index']
  #allocation1 [shape = 'u32[144,128]{1,0:T(1,128)}', space=vmem, size = 0x12000, scoped, tag = 'internal scratch']
  %s0 = inlined_call_operand.vmem [shape: f32[2,64], index: 0, kind: input, shape index: {}]
  %s1 = inlined_call_operand.hbm [shape: f32[64,128], index: 1, kind: input, shape index: {}]
  %s2 = inlined_call_operand.vmem [shape: f32[1,128], index: 2, kind: input, shape index: {}]
  %s3 = inlined_call_operand.hbm [shape: f32[128,32], index: 3, kind: input, shape index: {}]
  %s4 = inlined_call_operand.vmem [shape: f32[1,32], index: 4, kind: input, shape index: {}]
  %s5 = inlined_call_operand.vmem [shape: f32[32,8], index: 5, kind: input, shape index: {}]
  %s6 = inlined_call_operand.vmem [shape: f32[1,8], index: 6, kind: input, shape index: {}]
  %s7 = inlined_call_operand.hbm [shape: f32[2,8], index: 7, kind: output, shape index: {}]
  %s8 = sld [smem:[#allocation0]]
  $region46: #{_lambda_.1} parent=0
    _
  %s10 = ssub.s32 1, %s8
  %s11 = scalar_select 0, %s10, %s8
  $region1: #{_lambda_.1} parent=0
    #allocation2 [shape = 'u8[32768]{0}', space=vmem, size = 0x8000, scoped, tag = 'input window, operand 1, single buffered']
    #allocation3 [shape = 's32[1]{0}', space=sflag, size = 0x4, scoped, tag = 'scoped memory for _lambda_.1']
    #allocation4 [shape = 's32[1]{0}', space=sflag, size = 0x4, scoped, tag = 'scoped memory for _lambda_.1']
    #allocation5 [shape = 'u8[65536]{0}', space=vmem, size = 0x10000, scoped, tag = 'input window, operand 3, single buffered']
    #allocation6 [shape = 's32[1]{0}', space=sflag, size = 0x4, scoped, tag = 'scoped memory for _lambda_.1']
    #allocation7 [shape = 'u8[1024]{0}', space=vmem, size = 0x400, scoped, tag = 'output window, operand 0, single buffered']
    %12 = vsyncpa [#allocation3], 0
    %13 = vsyncpa [#allocation6], 0
    %14 = vsyncpa [#allocation4], 0
    // Predicated region
    $region2: #{_lambda_.1} parent=1 // pred_check
      _
    $region3: #{_lambda_.1} parent=1 // pred_check_branch
      %16 = sbr.rel (0) target = $region5
    $region4: #{_lambda_.1} parent=1 // pred_region
      _
    $region5: #{_lambda_.1} parent=1 // pred_fallthru
      _
    // Predicated region
    $region6: #{_lambda_.1} parent=1 // pred_check
      _
    $region7: #{_lambda_.1} parent=1 // pred_check_branch
      %18 = sbr.rel (0) target = $region9
    $region8: #{_lambda_.1} parent=1 // pred_region
      %s20 = ssub.s32 1024, 1024
      %21 = vsyncadd [#allocation3], %s20
      %s22 = sshll.u32 [#allocation2], 4
      %s23 = int_to_ptr.vmem [resolvable:$true] %s22
      %28 = dma.hbm_to_vmem [thread:$0]  %s1, 1024, %s23, [#allocation3], 128, 128, 8
    $region9: #{_lambda_.1} parent=1 // pred_fallthru
      _
    // Predicated region
    $region10: #{_lambda_.1} parent=1 // pred_check
      _
    $region11: #{_lambda_.1} parent=1 // pred_check_branch
      %30 = sbr.rel (0) target = $region13
    $region12: #{_lambda_.1} parent=1 // pred_region
      _
    $region13: #{_lambda_.1} parent=1 // pred_fallthru
      _
    // Predicated region
    $region14: #{_lambda_.1} parent=1 // pred_check
      _
    $region15: #{_lambda_.1} parent=1 // pred_check_branch
      %32 = sbr.rel (0) target = $region17
    $region16: #{_lambda_.1} parent=1 // pred_region
      %s34 = ssub.s32 2048, 2048
      %35 = vsyncadd [#allocation6], %s34
      %s36 = sshll.u32 [#allocation5], 4
      %s37 = int_to_ptr.vmem [resolvable:$true] %s36
      %42 = dma.hbm_to_vmem [thread:$0]  %s3, 2048, %s37, [#allocation6], 128, 128, 8
    $region17: #{_lambda_.1} parent=1 // pred_fallthru
      _
    // Predicated region
    $region18: #{_lambda_.1} parent=1 // pred_check
      _
    $region19: #{_lambda_.1} parent=1 // pred_check_branch
      %44 = sbr.rel (0) target = $region21
    $region20: #{_lambda_.1} parent=1 // pred_region
      _
    $region21: #{_lambda_.1} parent=1 // pred_fallthru
      _
    // Predicated region
    $region22: #{_lambda_.1} parent=1 // pred_check
      _
    $region23: #{_lambda_.1} parent=1 // pred_check_branch
      %46 = sbr.rel (0) target = $region25
    $region24: #{_lambda_.1} parent=1 // pred_region
      _
    $region25: #{_lambda_.1} parent=1 // pred_fallthru
      _
    // Predicated region
    $region26: #{_lambda_.1} parent=1 // pred_check
      _
    $region27: #{_lambda_.1} parent=1 // pred_check_branch
      %48 = sbr.rel (0) target = $region29
    $region28: #{_lambda_.1} parent=1 // pred_region
      _
    $region29: #{_lambda_.1} parent=1 // pred_fallthru
      _
    // Predicated region
    $region30: #{_lambda_.1} parent=1 // pred_check
      _
    $region31: #{_lambda_.1} parent=1 // pred_check_branch
      %50 = sbr.rel (0) target = $region33
    $region32: #{_lambda_.1} parent=1 // pred_region
      %51 = dma.done [#allocation3], 1024
    $region33: #{_lambda_.1} parent=1 // pred_fallthru
      _
    // Predicated region
    $region34: #{_lambda_.1} parent=1 // pred_check
      _
    $region35: #{_lambda_.1} parent=1 // pred_check_branch
      %53 = sbr.rel (0) target = $region37
    $region36: #{_lambda_.1} parent=1 // pred_region
      %54 = dma.done [#allocation6], 2048
    $region37: #{_lambda_.1} parent=1 // pred_fallthru
      _
    %v55 = vld [vmem:[%s0] sm:$0x3]
    %v56 = vld [vmem:[#allocation2] sm:$0xff]
    %v57 = vld [vmem:[#allocation2 + $0x8] sm:$0xff]
    %v58 = vld [vmem:[#allocation2 + $0x10] sm:$0xff]
    %v59 = vld [vmem:[#allocation2 + $0x18] sm:$0xff]
    %v60 = vld [vmem:[#allocation2 + $0x20] sm:$0xff]
    %v61 = vld [vmem:[#allocation2 + $0x28] sm:$0xff]
    %v62 = vld [vmem:[#allocation2 + $0x30] sm:$0xff]
    %v63 = vld [vmem:[#allocation2 + $0x38] sm:$0xff]
    %v64 = vld [vmem:[%s2] sm:$0x1]
    %v66 = vlaneseq
    %v67 = vshrl.u32 %v66, 7
    %v68 = vsub.s32 0, %v67
    %v69 = vrot.slane %v64, %v68
    %vm71 = vcmask 523264
    %v73 = vsel %vm71, %v55, 0
    %75 = vmatprep.subr.mxu0 0.0
    %76 = vmatpush1.msra.mxu0 0.0
    %77 = vmatprep.subr.mxu0 0.0
    %78 = vmatpush1.msra.mxu0 0.0
    %79 = vmatprep.subr.mxu0 0.0
    %80 = vmatpush1.msra.mxu0 0.0
    %81 = vmatprep.subr.mxu0 0.0
    %82 = vmatpush1.msra.mxu0 0.0
    %83 = vmatprep.subr.mxu0 0.0
    %84 = vmatpush1.msra.mxu0 0.0
    %85 = vmatprep.subr.mxu0 0.0
    %86 = vmatpush1.msra.mxu0 0.0
    %87 = vmatprep.subr.mxu0 0.0
    %88 = vmatpush1.msra.mxu0 0.0
    %89 = vmatprep.subr.mxu0 0.0
    %90 = vmatpush1.msra.mxu0 0.0
    %91 = vmatprep.subr.mxu0 0.0
    %92 = vmatpush1.msra.mxu0 %v63
    %93 = vmatprep.subr.mxu0 0.0
    %94 = vmatpush1.msra.mxu0 %v62
    %95 = vmatprep.subr.mxu0 0.0
    %96 = vmatpush1.msra.mxu0 %v61
    %97 = vmatprep.subr.mxu0 0.0
    %98 = vmatpush1.msra.mxu0 %v60
    %99 = vmatprep.subr.mxu0 0.0
    %100 = vmatpush1.msra.mxu0 %v59
    %101 = vmatprep.subr.mxu0 0.0
    %102 = vmatpush1.msra.mxu0 %v58
    %103 = vmatprep.subr.mxu0 0.0
    %104 = vmatpush1.msra.mxu0 %v57
    %105 = vmatprep.subr.mxu0 0.0
    %106 = vmatpush1.msra.mxu0 %v56
    %107 = vmatprep.subr.mxu0 0.0
    %108 = vmatpush2.msra.mxu0 0.0
    %109 = vmatprep.subr.mxu0 0.0
    %110 = vmatpush2.msra.mxu0 0.0
    %111 = vmatprep.subr.mxu0 0.0
    %112 = vmatpush2.msra.mxu0 0.0
    %113 = vmatprep.subr.mxu0 0.0
    %114 = vmatpush2.msra.mxu0 0.0
    %115 = vmatprep.subr.mxu0 0.0
    %116 = vmatpush2.msra.mxu0 0.0
    %117 = vmatprep.subr.mxu0 0.0
    %118 = vmatpush2.msra.mxu0 0.0
    %119 = vmatprep.subr.mxu0 0.0
    %120 = vmatpush2.msra.mxu0 0.0
    %121 = vmatprep.subr.mxu0 0.0
    %122 = vmatpush2.msra.mxu0 0.0
    %123 = vmatprep.subr.mxu0 0.0
    %124 = vmatpush2.msra.mxu0 0.0
    %125 = vmatprep.subr.mxu0 0.0
    %126 = vmatpush2.msra.mxu0 0.0
    %127 = vmatprep.subr.mxu0 0.0
    %128 = vmatpush2.msra.mxu0 0.0
    %129 = vmatprep.subr.mxu0 0.0
    %130 = vmatpush2.msra.mxu0 0.0
    %131 = vmatprep.subr.mxu0 0.0
    %132 = vmatpush2.msra.mxu0 0.0
    %133 = vmatprep.subr.mxu0 0.0
    %134 = vmatpush2.msra.mxu0 0.0
    %135 = vmatprep.subr.mxu0 0.0
    %136 = vmatpush2.msra.mxu0 0.0
    %137 = vmatprep.subr.mxu0 0.0
    %138 = vmatpush2.msra.mxu0 0.0
    %139 = vmatprep.mubr.f32.mxu0 0.0
    %140 = vmatmul.mubr.f32.gmra.mxu0 %v73
    %v141 = vpop.f32.mrf.mxu0
    %v142 = vadd.f32 %v69, %v141
    %v143 = vpop.f32.mrf.mxu0
    %144 = vdwg.mxu0
    %v145 = vmax.f32 %v142, 0.0
    %v146 = vld [vmem:[#allocation5] sm:$0xff]
    %v147 = vld [vmem:[#allocation5 + $0x8] sm:$0xff]
    %v148 = vld [vmem:[#allocation5 + $0x10] sm:$0xff]
    %v149 = vld [vmem:[#allocation5 + $0x18] sm:$0xff]
    %v150 = vld [vmem:[#allocation5 + $0x20] sm:$0xff]
    %v151 = vld [vmem:[#allocation5 + $0x28] sm:$0xff]
    %v152 = vld [vmem:[#allocation5 + $0x30] sm:$0xff]
    %v153 = vld [vmem:[#allocation5 + $0x38] sm:$0xff]
    %v154 = vld [vmem:[#allocation5 + $0x40] sm:$0xff]
    %v155 = vld [vmem:[#allocation5 + $0x48] sm:$0xff]
    %v156 = vld [vmem:[#allocation5 + $0x50] sm:$0xff]
    %v157 = vld [vmem:[#allocation5 + $0x58] sm:$0xff]
    %v158 = vld [vmem:[#allocation5 + $0x60] sm:$0xff]
    %v159 = vld [vmem:[#allocation5 + $0x68] sm:$0xff]
    %v160 = vld [vmem:[#allocation5 + $0x70] sm:$0xff]
    %v161 = vld [vmem:[#allocation5 + $0x78] sm:$0xff]
    %v162 = vld [vmem:[%s4] sm:$0x1]
    %v164 = vlaneseq
    %v165 = vshrl.u32 %v164, 7
    %v166 = vsub.s32 0, %v165
    %v167 = vrot.slane %v162, %v166
    %169 = vmatprep.subr.mxu0 0.0
    %170 = vmatpush1.msra.mxu0 %v161
    %171 = vmatprep.subr.mxu0 0.0
    %172 = vmatpush1.msra.mxu0 %v160
    %173 = vmatprep.subr.mxu0 0.0
    %174 = vmatpush1.msra.mxu0 %v159
    %175 = vmatprep.subr.mxu0 0.0
    %176 = vmatpush1.msra.mxu0 %v158
    %177 = vmatprep.subr.mxu0 0.0
    %178 = vmatpush1.msra.mxu0 %v157
    %179 = vmatprep.subr.mxu0 0.0
    %180 = vmatpush1.msra.mxu0 %v156
    %181 = vmatprep.subr.mxu0 0.0
    %182 = vmatpush1.msra.mxu0 %v155
    %183 = vmatprep.subr.mxu0 0.0
    %184 = vmatpush1.msra.mxu0 %v154
    %185 = vmatprep.subr.mxu0 0.0
    %186 = vmatpush1.msra.mxu0 %v153
    %187 = vmatprep.subr.mxu0 0.0
    %188 = vmatpush1.msra.mxu0 %v152
    %189 = vmatprep.subr.mxu0 0.0
    %190 = vmatpush1.msra.mxu0 %v151
    %191 = vmatprep.subr.mxu0 0.0
    %192 = vmatpush1.msra.mxu0 %v150
    %193 = vmatprep.subr.mxu0 0.0
    %194 = vmatpush1.msra.mxu0 %v149
    %195 = vmatprep.subr.mxu0 0.0
    %196 = vmatpush1.msra.mxu0 %v148
    %197 = vmatprep.subr.mxu0 0.0
    %198 = vmatpush1.msra.mxu0 %v147
    %199 = vmatprep.subr.mxu0 0.0
    %200 = vmatpush1.msra.mxu0 %v146
    %201 = vmatprep.subr.mxu0 0.0
    %202 = vmatpush2.msra.mxu0 0.0
    %203 = vmatprep.subr.mxu0 0.0
    %204 = vmatpush2.msra.mxu0 0.0
    %205 = vmatprep.subr.mxu0 0.0
    %206 = vmatpush2.msra.mxu0 0.0
    %207 = vmatprep.subr.mxu0 0.0
    %208 = vmatpush2.msra.mxu0 0.0
    %209 = vmatprep.subr.mxu0 0.0
    %210 = vmatpush2.msra.mxu0 0.0
    %211 = vmatprep.subr.mxu0 0.0
    %212 = vmatpush2.msra.mxu0 0.0
    %213 = vmatprep.subr.mxu0 0.0
    %214 = vmatpush2.msra.mxu0 0.0
    %215 = vmatprep.subr.mxu0 0.0
    %216 = vmatpush2.msra.mxu0 0.0
    %217 = vmatprep.subr.mxu0 0.0
    %218 = vmatpush2.msra.mxu0 0.0
    %219 = vmatprep.subr.mxu0 0.0
    %220 = vmatpush2.msra.mxu0 0.0
    %221 = vmatprep.subr.mxu0 0.0
    %222 = vmatpush2.msra.mxu0 0.0
    %223 = vmatprep.subr.mxu0 0.0
    %224 = vmatpush2.msra.mxu0 0.0
    %225 = vmatprep.subr.mxu0 0.0
    %226 = vmatpush2.msra.mxu0 0.0
    %227 = vmatprep.subr.mxu0 0.0
    %228 = vmatpush2.msra.mxu0 0.0
    %229 = vmatprep.subr.mxu0 0.0
    %230 = vmatpush2.msra.mxu0 0.0
    %231 = vmatprep.subr.mxu0 0.0
    %232 = vmatpush2.msra.mxu0 0.0
    %233 = vmatprep.mubr.f32.mxu0 0.0
    %234 = vmatmul.mubr.f32.gmra.mxu0 %v145
    %v235 = vpop.f32.mrf.mxu0
    %v236 = vadd.f32 %v167, %v235
    %v237 = vpop.f32.mrf.mxu0
    %238 = vdwg.mxu0
    %v239 = vmax.f32 %v236, 0.0
    %v240 = vld [vmem:[%s5] sm:$0xff]
    %v241 = vld [vmem:[%s5 + $0x8] sm:$0xff]
    %v242 = vld [vmem:[%s5 + $0x10] sm:$0xff]
    %v243 = vld [vmem:[%s5 + $0x18] sm:$0xff]
    %v244 = vld [vmem:[%s6] sm:$0x1]
    %v246 = vlaneseq
    %v247 = vshrl.u32 %v246, 7
    %v248 = vsub.s32 0, %v247
    %v249 = vrot.slane %v244, %v248
    %vm251 = vcmask 261120
    %v253 = vsel %vm251, %v239, 0
    %255 = vmatprep.subr.mxu0 0.0
    %256 = vmatpush1.msra.mxu0 0.0
    %257 = vmatprep.subr.mxu0 0.0
    %258 = vmatpush1.msra.mxu0 0.0
    %259 = vmatprep.subr.mxu0 0.0
    %260 = vmatpush1.msra.mxu0 0.0
    %261 = vmatprep.subr.mxu0 0.0
    %262 = vmatpush1.msra.mxu0 0.0
    %263 = vmatprep.subr.mxu0 0.0
    %264 = vmatpush1.msra.mxu0 0.0
    %265 = vmatprep.subr.mxu0 0.0
    %266 = vmatpush1.msra.mxu0 0.0
    %267 = vmatprep.subr.mxu0 0.0
    %268 = vmatpush1.msra.mxu0 0.0
    %269 = vmatprep.subr.mxu0 0.0
    %270 = vmatpush1.msra.mxu0 0.0
    %271 = vmatprep.subr.mxu0 0.0
    %272 = vmatpush1.msra.mxu0 0.0
    %273 = vmatprep.subr.mxu0 0.0
    %274 = vmatpush1.msra.mxu0 0.0
    %275 = vmatprep.subr.mxu0 0.0
    %276 = vmatpush1.msra.mxu0 0.0
    %277 = vmatprep.subr.mxu0 0.0
    %278 = vmatpush1.msra.mxu0 0.0
    %279 = vmatprep.subr.mxu0 0.0
    %280 = vmatpush1.msra.mxu0 %v243
    %281 = vmatprep.subr.mxu0 0.0
    %282 = vmatpush1.msra.mxu0 %v242
    %283 = vmatprep.subr.mxu0 0.0
    %284 = vmatpush1.msra.mxu0 %v241
    %285 = vmatprep.subr.mxu0 0.0
    %286 = vmatpush1.msra.mxu0 %v240
    %287 = vmatprep.subr.mxu0 0.0
    %288 = vmatpush2.msra.mxu0 0.0
    %289 = vmatprep.subr.mxu0 0.0
    %290 = vmatpush2.msra.mxu0 0.0
    %291 = vmatprep.subr.mxu0 0.0
    %292 = vmatpush2.msra.mxu0 0.0
    %293 = vmatprep.subr.mxu0 0.0
    %294 = vmatpush2.msra.mxu0 0.0
    %295 = vmatprep.subr.mxu0 0.0
    %296 = vmatpush2.msra.mxu0 0.0
    %297 = vmatprep.subr.mxu0 0.0
    %298 = vmatpush2.msra.mxu0 0.0
    %299 = vmatprep.subr.mxu0 0.0
    %300 = vmatpush2.msra.mxu0 0.0
    %301 = vmatprep.subr.mxu0 0.0
    %302 = vmatpush2.msra.mxu0 0.0
    %303 = vmatprep.subr.mxu0 0.0
    %304 = vmatpush2.msra.mxu0 0.0
    %305 = vmatprep.subr.mxu0 0.0
    %306 = vmatpush2.msra.mxu0 0.0
    %307 = vmatprep.subr.mxu0 0.0
    %308 = vmatpush2.msra.mxu0 0.0
    %309 = vmatprep.subr.mxu0 0.0
    %310 = vmatpush2.msra.mxu0 0.0
    %311 = vmatprep.subr.mxu0 0.0
    %312 = vmatpush2.msra.mxu0 0.0
    %313 = vmatprep.subr.mxu0 0.0
    %314 = vmatpush2.msra.mxu0 0.0
    %315 = vmatprep.subr.mxu0 0.0
    %316 = vmatpush2.msra.mxu0 0.0
    %317 = vmatprep.subr.mxu0 0.0
    %318 = vmatpush2.msra.mxu0 0.0
    %319 = vmatprep.mubr.f32.mxu0 0.0
    %320 = vmatmul.mubr.f32.gmra.mxu0 %v253
    %v321 = vpop.f32.mrf.mxu0
    %v322 = vadd.f32 %v249, %v321
    %v323 = vpop.f32.mrf.mxu0
    %324 = vdwg.mxu0
    %vm325 = vcmask 58368
    %v326 = vsel %vm325, %v322, -inf
    %327 = vmax.xlane.f32.xlu0 %v326
    %v328 = vpop.xlane.xlu0 %327
    %v329 = vsub.f32 %v322, %v328
    %v330 = vmul.f32 %v329, 1.442695
    %v331 = vpow.pop %v330
    %v332 = vsel %vm325, %v331, 0.0
    %333 = vadd.xlane.f32.xlu0 %v332
    %v334 = vpop.xlane.xlu0 %333
    %v335 = vrcp.pop %v334
    %v336 = vmul.f32 %v331, %v335
    %337 = vst.msk [vmem:[#allocation7] sm:$0x3] %vm325, %v336
    // Predicated region
    $region38: #{_lambda_.1} parent=1 // pred_check
      _
    $region39: #{_lambda_.1} parent=1 // pred_check_branch
      %339 = sbr.rel (0) target = $region41
    $region40: #{_lambda_.1} parent=1 // pred_region
      %s341 = ssub.s32 32, 32
      %342 = vsyncadd [#allocation4], %s341
      %s344 = sshll.u32 [#allocation7], 4
      %s345 = int_to_ptr.vmem [resolvable:$true] %s344
      %347 = dma.vmem_to_hbm [thread:$0]  %s345, 32, %s7, [#allocation4]
    $region41: #{_lambda_.1} parent=1 // pred_fallthru
      _
    // Predicated region
    $region42: #{_lambda_.1} parent=1 // pred_check
      _
    $region43: #{_lambda_.1} parent=1 // pred_check_branch
      %349 = sbr.rel (0) target = $region45
    $region44: #{_lambda_.1} parent=1 // pred_region
      %350 = dma.done [#allocation4], 32
    $region45: #{_lambda_.1} parent=1 // pred_fallthru
      _
    %351 = vsyncpa [#allocation3], 1
    %352 = vsyncpa [#allocation6], 1
    %353 = vsyncpa [#allocation4], 1

</llo_original>
